<compile_context>
chip_gen: v7x
topology: tpu7x:2x2x1
jax: 0.10.0
libtpu: 0.0.40
codegen_flags: <defaults>
</compile_context>

<pallas_src>
import functools
import math

import jax
import jax.numpy as jnp
from jax.experimental import pallas as pl
from jax.experimental.pallas import tpu as pltpu


def _round_up(x, m):
    return (x + m - 1) // m * m


def _gcn_cell_kernel(x_ref, adj_ref, w_ref, b_ref, o_ref, *, batch, num_node):
    # x_ref:   (B*N, Fp)  node features, batch flattened into rows (compute dtype)
    # adj_ref: (N, N)     adjacency (compute dtype)
    # w_ref:   (Fp, Op)   dense weight, zero-padded (compute dtype)
    # b_ref:   (1, Op)    bias row, zero-padded (float32)
    # o_ref:   (B*N, Op)  lane-dense output slab
    x = x_ref[...]
    adj = adj_ref[...]
    w = w_ref[...]
    bias = b_ref[...]

    # Dense projection first (associativity: (adj @ x) @ W == adj @ (x @ W)).
    # Single MXU matmul covering every batch row: (B*N, Fp) @ (Fp, Op) -> f32.
    z = jnp.dot(x, w, preferred_element_type=jnp.float32)
    z = z.astype(x.dtype)  # back to compute dtype for the second MXU pass

    # Graph aggregation per batch, statically unrolled (batch is tiny and known
    # at trace time).  Each matmul is (N, N) @ (N, Op) with Op lane-dense.
    n = num_node
    rows = []
    for b in range(batch):
        zb = z[b * n:(b + 1) * n, :]
        yb = jnp.dot(adj, zb, preferred_element_type=jnp.float32) + bias
        rows.append(jnp.maximum(yb, 0.0))
    y = jnp.concatenate(rows, axis=0) if batch > 1 else rows[0]

    # One lane-dense (multiple-of-128 wide) store for the whole output.
    o_ref[...] = y.astype(o_ref.dtype)


def gcn_cell(inputs, adj, weight, bias, *, compute_dtype=jnp.bfloat16):
    """inputs: (B, N, F), adj: (N, N), weight: (F, O), bias: (O,) -> (B, N, O)."""
    B, N, F = inputs.shape
    O = weight.shape[1]
    Fp = _round_up(F, 128)   # pad contraction dim (zeros contribute nothing)
    Op = _round_up(O, 128)   # pad output lanes -> unmasked vector stores

    # Wrapper-side layout plumbing: flatten batch into rows, zero-pad, cast.
    x2 = jnp.pad(inputs.reshape(B * N, F), ((0, 0), (0, Fp - F))).astype(compute_dtype)
    adj_c = adj.astype(compute_dtype)
    wp = jnp.pad(weight, ((0, Fp - F), (0, Op - O))).astype(compute_dtype)
    bp = jnp.pad(bias, (0, Op - O)).reshape(1, Op).astype(jnp.float32)

    flops = 2 * B * N * F * O + 2 * B * N * N * O
    bytes_accessed = (x2.size * x2.dtype.itemsize
                      + adj_c.size * adj_c.dtype.itemsize
                      + wp.size * wp.dtype.itemsize
                      + bp.size * bp.dtype.itemsize
                      + B * N * Op * inputs.dtype.itemsize)

    out2 = pl.pallas_call(
        functools.partial(_gcn_cell_kernel, batch=B, num_node=N),
        out_shape=jax.ShapeDtypeStruct((B * N, Op), inputs.dtype),
        grid_spec=pltpu.PrefetchScalarGridSpec(
            num_scalar_prefetch=0,
            grid=(1,),  # whole problem in one step: no per-batch pipeline overhead
            in_specs=[
                pl.BlockSpec((B * N, Fp), lambda i: (0, 0)),  # features (flattened)
                pl.BlockSpec((N, N), lambda i: (0, 0)),       # adjacency
                pl.BlockSpec((Fp, Op), lambda i: (0, 0)),     # weight
                pl.BlockSpec((1, Op), lambda i: (0, 0)),      # bias
            ],
            out_specs=pl.BlockSpec((B * N, Op), lambda i: (0, 0)),
        ),
        compiler_params=pltpu.CompilerParams(
            dimension_semantics=("arbitrary",),
        ),
        cost_estimate=pl.CostEstimate(
            flops=flops, transcendentals=0, bytes_accessed=bytes_accessed),
    )(x2, adj_c, wp, bp)

    # Undo the layout plumbing: (B*N, Op) -> (B, N, O).
    return out2.reshape(B, N, Op)[:, :, :O]


def gcn_cell_ref(inputs, adj, weight, bias):
    # Pure-JAX reference matching the PyTorch forward exactly (f32 throughout).
    lfs = jnp.einsum('ij,jbf->bif', adj, jnp.transpose(inputs, (1, 0, 2)))
    return jax.nn.relu(jnp.matmul(lfs, weight) + bias)


if __name__ == "__main__":
    key = jax.random.PRNGKey(0)
    k_x, k_adj, k_w = jax.random.split(key, 3)

    # Small shapes implied by the forward: batch=2, num_node=16,
    # in_features=32, out_features=32.
    B, N, Fin, Fout = 2, 16, 32, 32

    inputs = jax.random.normal(k_x, (B, N, Fin), dtype=jnp.float32)
    adj = jax.random.uniform(k_adj, (N, N), dtype=jnp.float32)

    # Deterministic parameter init mirroring reset_parameter():
    #   weight ~ U(-stdv, stdv) with stdv = 1/sqrt(out_features); bias = 0.
    stdv = 1.0 / math.sqrt(Fout)
    weight = jax.random.uniform(k_w, (Fin, Fout), dtype=jnp.float32,
                                minval=-stdv, maxval=stdv)
    bias = jnp.zeros((Fout,), dtype=jnp.float32)

    ref = gcn_cell_ref(inputs, adj, weight, bias)

    # 1) f32 compute path: tight check (only reassociation-level differences).
    out_f32 = jax.block_until_ready(
        gcn_cell(inputs, adj, weight, bias, compute_dtype=jnp.float32))
    assert out_f32.shape == (B, N, Fout)
    assert jnp.allclose(out_f32, ref, atol=1e-4, rtol=1e-4), "f32 mismatch vs reference"

    # 2) default bf16-operand path (v6e/v7x MXU peak): relaxed tolerance.
    out_bf16 = jax.block_until_ready(gcn_cell(inputs, adj, weight, bias))
    assert out_bf16.shape == (B, N, Fout)
    assert jnp.allclose(out_bf16, ref, atol=5e-2, rtol=5e-2), "bf16 mismatch vs reference"

    print("KERNEL_OK")
</pallas_src>

<mosaic_0001>
module attributes {stable_mosaic.version = 11 : i64} {
  func.func @_gcn_cell_kernel(%arg0: i32, %arg1: memref<32x128xf32, #tpu.memory_space<vmem>>, %arg2: memref<16x16xf32, #tpu.memory_space<vmem>>, %arg3: memref<128x128xf32, #tpu.memory_space<vmem>>, %arg4: memref<1x128xf32, #tpu.memory_space<vmem>>, %arg5: memref<32x128xf32, #tpu.memory_space<vmem>>) attributes {dimension_semantics = [#tpu.dimension_semantics<arbitrary>], iteration_bounds = array<i64: 1>, scalar_prefetch = 0 : i64, scratch_operands = 0 : i64, tpu.core_type = #tpu.core_type<tc>, window_params = [{pipeline_mode = #tpu.pipeline_mode<synchronous>, transform_indices = @transform_0, window_bounds = array<i64: 32, 128>}, {pipeline_mode = #tpu.pipeline_mode<synchronous>, transform_indices = @transform_1, window_bounds = array<i64: 16, 16>}, {pipeline_mode = #tpu.pipeline_mode<synchronous>, transform_indices = @transform_2, window_bounds = array<i64: 128, 128>}, {pipeline_mode = #tpu.pipeline_mode<synchronous>, transform_indices = @transform_3, window_bounds = array<i64: 1, 128>}, {pipeline_mode = #tpu.pipeline_mode<synchronous>, transform_indices = @transform_4, window_bounds = array<i64: 32, 128>}]} {
    %c0 = arith.constant 0 : index
    %c0_0 = arith.constant 0 : index
    %0 = vector.load %arg1[%c0, %c0_0] : memref<32x128xf32, #tpu.memory_space<vmem>>, vector<32x128xf32>
    %c0_1 = arith.constant 0 : index
    %c0_2 = arith.constant 0 : index
    %1 = vector.load %arg2[%c0_1, %c0_2] : memref<16x16xf32, #tpu.memory_space<vmem>>, vector<16x16xf32>
    %c0_3 = arith.constant 0 : index
    %c0_4 = arith.constant 0 : index
    %2 = vector.load %arg3[%c0_3, %c0_4] : memref<128x128xf32, #tpu.memory_space<vmem>>, vector<128x128xf32>
    %c0_5 = arith.constant 0 : index
    %c0_6 = arith.constant 0 : index
    %3 = vector.load %arg4[%c0_5, %c0_6] : memref<1x128xf32, #tpu.memory_space<vmem>>, vector<1x128xf32>
    %cst = arith.constant dense<0.000000e+00> : vector<32x128xf32>
    %4 = tpu.matmul %0, %2, %cst {dimension_numbers = #tpu.dot_dimension_numbers<[1], [0], [0], [1], [0, 0, 1, 1], [], []>} : vector<32x128xf32>, vector<128x128xf32>, vector<32x128xf32> -> vector<32x128xf32>
    %5 = vector.extract_strided_slice %4 {offsets = [0, 0], sizes = [16, 128], strides = [1, 1]} : vector<32x128xf32> to vector<16x128xf32>
    %cst_7 = arith.constant dense<0.000000e+00> : vector<16x128xf32>
    %6 = tpu.matmul %1, %5, %cst_7 {dimension_numbers = #tpu.dot_dimension_numbers<[1], [0], [0], [1], [0, 0, 1, 1], [], []>} : vector<16x16xf32>, vector<16x128xf32>, vector<16x128xf32> -> vector<16x128xf32>
    %7 = vector.broadcast %3 : vector<1x128xf32> to vector<16x128xf32>
    %8 = arith.addf %6, %7 : vector<16x128xf32>
    %cst_8 = arith.constant 0.000000e+00 : f32
    %9 = vector.broadcast %cst_8 : f32 to vector<16x128xf32>
    %10 = arith.maximumf %8, %9 : vector<16x128xf32>
    %11 = vector.extract_strided_slice %4 {offsets = [16, 0], sizes = [16, 128], strides = [1, 1]} : vector<32x128xf32> to vector<16x128xf32>
    %cst_9 = arith.constant dense<0.000000e+00> : vector<16x128xf32>
    %12 = tpu.matmul %1, %11, %cst_9 {dimension_numbers = #tpu.dot_dimension_numbers<[1], [0], [0], [1], [0, 0, 1, 1], [], []>} : vector<16x16xf32>, vector<16x128xf32>, vector<16x128xf32> -> vector<16x128xf32>
    %13 = vector.broadcast %3 : vector<1x128xf32> to vector<16x128xf32>
    %14 = arith.addf %12, %13 : vector<16x128xf32>
    %cst_10 = arith.constant 0.000000e+00 : f32
    %15 = vector.broadcast %cst_10 : f32 to vector<16x128xf32>
    %16 = arith.maximumf %14, %15 : vector<16x128xf32>
    %17 = tpu.concatenate %10, %16 in 0 : vector<16x128xf32>, vector<16x128xf32> -> vector<32x128xf32>
    %c0_11 = arith.constant 0 : index
    %c0_12 = arith.constant 0 : index
    %18 = vector.load %arg5[%c0_11, %c0_12] : memref<32x128xf32, #tpu.memory_space<vmem>>, vector<32x128xf32>
    tpu.vector_store %arg5[%c0_11, %c0_12], %17 {strides = array<i32>} : memref<32x128xf32, #tpu.memory_space<vmem>>, vector<32x128xf32>,
    return
  }
  func.func @transform_0(%arg0: i32) -> (i32, i32) {
    %c0_i32 = arith.constant 0 : i32
    %c0_i32_0 = arith.constant 0 : i32
    %c0_i32_1 = arith.constant 0 : i32
    return %c0_i32, %c0_i32_0 : i32, i32
  }
  func.func @transform_1(%arg0: i32) -> (i32, i32) {
    %c0_i32 = arith.constant 0 : i32
    %c0_i32_0 = arith.constant 0 : i32
    %c0_i32_1 = arith.constant 0 : i32
    return %c0_i32, %c0_i32_0 : i32, i32
  }
  func.func @transform_2(%arg0: i32) -> (i32, i32) {
    %c0_i32 = arith.constant 0 : i32
    %c0_i32_0 = arith.constant 0 : i32
    %c0_i32_1 = arith.constant 0 : i32
    return %c0_i32, %c0_i32_0 : i32, i32
  }
  func.func @transform_3(%arg0: i32) -> (i32, i32) {
    %c0_i32 = arith.constant 0 : i32
    %c0_i32_0 = arith.constant 0 : i32
    %c0_i32_1 = arith.constant 0 : i32
    return %c0_i32, %c0_i32_0 : i32, i32
  }
  func.func @transform_4(%arg0: i32) -> (i32, i32) {
    %c0_i32 = arith.constant 0 : i32
    %c0_i32_0 = arith.constant 0 : i32
    %c0_i32_1 = arith.constant 0 : i32
    return %c0_i32, %c0_i32_0 : i32, i32
  }
}

</mosaic_0001>

<llo_original>
// kernel: tpu_custom_call.1
$region0: #{tpu_custom_call.1}
  #allocation0 [shape = 'u32[]', space=smem, size = 0x4, offset = 0x4, fixed_abs, tag = 'smem constant byte address 0x4 - core index']
  #allocation1 [shape = 'u32[144,128]{1,0:T(1,128)}', space=vmem, size = 0x12000, scoped, tag = 'internal scratch']
  %s0 = inlined_call_operand.hbm [shape: f32[32,128], index: 0, kind: input, shape index: {}]
  %s1 = inlined_call_operand.hbm [shape: f32[16,16], index: 1, kind: input, shape index: {}]
  %s2 = inlined_call_operand.hbm [shape: f32[128,128], index: 2, kind: input, shape index: {}]
  %s3 = inlined_call_operand.vmem [shape: f32[1,128], index: 3, kind: input, shape index: {}]
  %s4 = inlined_call_operand.hbm [shape: f32[32,128], index: 4, kind: output, shape index: {}]
  %s5 = sld [smem:[#allocation0]]
  $region38: #{tpu_custom_call.1} parent=0
    _
  %s7 = ssub.s32 1, %s5
  %s8 = scalar_select 0, %s7, %s5
  $region1: #{tpu_custom_call.1} parent=0
    #allocation2 [shape = 'u8[16384]{0}', space=vmem, size = 0x4000, scoped, tag = 'input window, operand 0, single buffered']
    #allocation3 [shape = 's32[1]{0}', space=sflag, size = 0x4, scoped, tag = 'scoped memory for tpu_custom_call.1']
    #allocation4 [shape = 's32[1]{0}', space=sflag, size = 0x4, scoped, tag = 'scoped memory for tpu_custom_call.1']
    #allocation5 [shape = 'u8[8192]{0}', space=vmem, size = 0x2000, scoped, tag = 'input window, operand 1, single buffered']
    #allocation6 [shape = 's32[1]{0}', space=sflag, size = 0x4, scoped, tag = 'scoped memory for tpu_custom_call.1']
    #allocation7 [shape = 'u8[65536]{0}', space=vmem, size = 0x10000, scoped, tag = 'input window, operand 2, single buffered']
    #allocation8 [shape = 'u8[16384]{0}', space=vmem, size = 0x4000, scoped, tag = 'output window, operand 0, single buffered']
    %9 = vsyncpa [#allocation3], 0
    %10 = vsyncpa [#allocation6], 0
    %11 = vsyncpa [#allocation4], 0
    // Predicated region
    $region2: #{tpu_custom_call.1} parent=1 // pred_check
      _
    $region3: #{tpu_custom_call.1} parent=1 // pred_check_branch
      %13 = sbr.rel (0) target = $region5
    $region4: #{tpu_custom_call.1} parent=1 // pred_region
      %s15 = ssub.s32 512, 512
      %16 = vsyncadd [#allocation3], %s15
      %s17 = sshll.u32 [#allocation2], 4
      %s18 = int_to_ptr.vmem [resolvable:$true] %s17
      %23 = dma.hbm_to_vmem [thread:$0]  %s0, 512, %s18, [#allocation3], 128, 128, 8
    $region5: #{tpu_custom_call.1} parent=1 // pred_fallthru
      _
    // Predicated region
    $region6: #{tpu_custom_call.1} parent=1 // pred_check
      _
    $region7: #{tpu_custom_call.1} parent=1 // pred_check_branch
      %25 = sbr.rel (0) target = $region9
    $region8: #{tpu_custom_call.1} parent=1 // pred_region
      %s27 = ssub.s32 256, 256
      %28 = vsyncadd [#allocation6], %s27
      %s29 = sshll.u32 [#allocation5], 4
      %s30 = int_to_ptr.vmem [resolvable:$true] %s29
      %35 = dma.hbm_to_vmem [thread:$0]  %s1, 256, %s30, [#allocation6], 128, 128, 8
    $region9: #{tpu_custom_call.1} parent=1 // pred_fallthru
      _
    // Predicated region
    $region10: #{tpu_custom_call.1} parent=1 // pred_check
      _
    $region11: #{tpu_custom_call.1} parent=1 // pred_check_branch
      %37 = sbr.rel (0) target = $region13
    $region12: #{tpu_custom_call.1} parent=1 // pred_region
      %s39 = ssub.s32 2048, 2048
      %40 = vsyncadd [#allocation6], %s39
      %s41 = sshll.u32 [#allocation7], 4
      %s42 = int_to_ptr.vmem [resolvable:$true] %s41
      %47 = dma.hbm_to_vmem [thread:$0]  %s2, 2048, %s42, [#allocation6], 128, 128, 8
    $region13: #{tpu_custom_call.1} parent=1 // pred_fallthru
      _
    // Predicated region
    $region14: #{tpu_custom_call.1} parent=1 // pred_check
      _
    $region15: #{tpu_custom_call.1} parent=1 // pred_check_branch
      %49 = sbr.rel (0) target = $region17
    $region16: #{tpu_custom_call.1} parent=1 // pred_region
      _
    $region17: #{tpu_custom_call.1} parent=1 // pred_fallthru
      _
    // Predicated region
    $region18: #{tpu_custom_call.1} parent=1 // pred_check
      _
    $region19: #{tpu_custom_call.1} parent=1 // pred_check_branch
      %51 = sbr.rel (0) target = $region21
    $region20: #{tpu_custom_call.1} parent=1 // pred_region
      %52 = dma.done [#allocation3], 512
    $region21: #{tpu_custom_call.1} parent=1 // pred_fallthru
      _
    // Predicated region
    $region22: #{tpu_custom_call.1} parent=1 // pred_check
      _
    $region23: #{tpu_custom_call.1} parent=1 // pred_check_branch
      %54 = sbr.rel (0) target = $region25
    $region24: #{tpu_custom_call.1} parent=1 // pred_region
      %55 = dma.done [#allocation6], 256
    $region25: #{tpu_custom_call.1} parent=1 // pred_fallthru
      _
    // Predicated region
    $region26: #{tpu_custom_call.1} parent=1 // pred_check
      _
    $region27: #{tpu_custom_call.1} parent=1 // pred_check_branch
      %57 = sbr.rel (0) target = $region29
    $region28: #{tpu_custom_call.1} parent=1 // pred_region
      %58 = dma.done [#allocation6], 2048
    $region29: #{tpu_custom_call.1} parent=1 // pred_fallthru
      _
    %v59 = vld [vmem:[#allocation2] sm:$0xff]
    %v60 = vld [vmem:[#allocation2 + $0x8] sm:$0xff]
    %v61 = vld [vmem:[#allocation2 + $0x10] sm:$0xff]
    %v62 = vld [vmem:[#allocation2 + $0x18] sm:$0xff]
    %v63 = vld [vmem:[#allocation5] sm:$0xff]
    %v64 = vld [vmem:[#allocation5 + $0x8] sm:$0xff]
    %v65 = vld [vmem:[#allocation7] sm:$0xff]
    %v66 = vld [vmem:[#allocation7 + $0x8] sm:$0xff]
    %v67 = vld [vmem:[#allocation7 + $0x10] sm:$0xff]
    %v68 = vld [vmem:[#allocation7 + $0x18] sm:$0xff]
    %v69 = vld [vmem:[#allocation7 + $0x20] sm:$0xff]
    %v70 = vld [vmem:[#allocation7 + $0x28] sm:$0xff]
    %v71 = vld [vmem:[#allocation7 + $0x30] sm:$0xff]
    %v72 = vld [vmem:[#allocation7 + $0x38] sm:$0xff]
    %v73 = vld [vmem:[#allocation7 + $0x40] sm:$0xff]
    %v74 = vld [vmem:[#allocation7 + $0x48] sm:$0xff]
    %v75 = vld [vmem:[#allocation7 + $0x50] sm:$0xff]
    %v76 = vld [vmem:[#allocation7 + $0x58] sm:$0xff]
    %v77 = vld [vmem:[#allocation7 + $0x60] sm:$0xff]
    %v78 = vld [vmem:[#allocation7 + $0x68] sm:$0xff]
    %v79 = vld [vmem:[#allocation7 + $0x70] sm:$0xff]
    %v80 = vld [vmem:[#allocation7 + $0x78] sm:$0xff]
    %v81 = vld [vmem:[%s3] sm:$0x1]
    %82 = vmatprep.subr.mxu0 0.0
    %83 = vmatpush1.msra.mxu0 %v65
    %84 = vmatprep.subr.mxu0 0.0
    %85 = vmatpush1.msra.mxu0 %v66
    %86 = vmatprep.subr.mxu0 0.0
    %87 = vmatpush1.msra.mxu0 %v67
    %88 = vmatprep.subr.mxu0 0.0
    %89 = vmatpush1.msra.mxu0 %v68
    %90 = vmatprep.subr.mxu0 0.0
    %91 = vmatpush1.msra.mxu0 %v69
    %92 = vmatprep.subr.mxu0 0.0
    %93 = vmatpush1.msra.mxu0 %v70
    %94 = vmatprep.subr.mxu0 0.0
    %95 = vmatpush1.msra.mxu0 %v71
    %96 = vmatprep.subr.mxu0 0.0
    %97 = vmatpush1.msra.mxu0 %v72
    %98 = vmatprep.subr.mxu0 0.0
    %99 = vmatpush1.msra.mxu0 %v73
    %100 = vmatprep.subr.mxu0 0.0
    %101 = vmatpush1.msra.mxu0 %v74
    %102 = vmatprep.subr.mxu0 0.0
    %103 = vmatpush1.msra.mxu0 %v75
    %104 = vmatprep.subr.mxu0 0.0
    %105 = vmatpush1.msra.mxu0 %v76
    %106 = vmatprep.subr.mxu0 0.0
    %107 = vmatpush1.msra.mxu0 %v77
    %108 = vmatprep.subr.mxu0 0.0
    %109 = vmatpush1.msra.mxu0 %v78
    %110 = vmatprep.subr.mxu0 0.0
    %111 = vmatpush1.msra.mxu0 %v79
    %112 = vmatprep.subr.mxu0 0.0
    %113 = vmatpush1.msra.mxu0 %v80
    %114 = vmatprep.subr.mxu0 0.0
    %115 = vmatpush1.msra.mxu0 0.0
    %116 = vmatprep.subr.mxu0 0.0
    %117 = vmatpush1.msra.mxu0 0.0
    %118 = vmatprep.subr.mxu0 0.0
    %119 = vmatpush1.msra.mxu0 0.0
    %120 = vmatprep.subr.mxu0 0.0
    %121 = vmatpush1.msra.mxu0 0.0
    %122 = vmatprep.subr.mxu0 0.0
    %123 = vmatpush1.msra.mxu0 0.0
    %124 = vmatprep.subr.mxu0 0.0
    %125 = vmatpush1.msra.mxu0 0.0
    %126 = vmatprep.subr.mxu0 0.0
    %127 = vmatpush1.msra.mxu0 0.0
    %128 = vmatprep.subr.mxu0 0.0
    %129 = vmatpush1.msra.mxu0 0.0
    %130 = vmatprep.subr.mxu0 0.0
    %131 = vmatpush1.msra.mxu0 0.0
    %132 = vmatprep.subr.mxu0 0.0
    %133 = vmatpush1.msra.mxu0 0.0
    %134 = vmatprep.subr.mxu0 0.0
    %135 = vmatpush1.msra.mxu0 0.0
    %136 = vmatprep.subr.mxu0 0.0
    %137 = vmatpush1.msra.mxu0 0.0
    %138 = vmatprep.subr.mxu0 0.0
    %139 = vmatpush1.msra.mxu0 0.0
    %140 = vmatprep.subr.mxu0 0.0
    %141 = vmatpush1.msra.mxu0 0.0
    %142 = vmatprep.subr.mxu0 0.0
    %143 = vmatpush1.msra.mxu0 0.0
    %144 = vmatprep.subr.mxu0 0.0
    %145 = vmatpush1.msra.mxu0 0.0
    %146 = vmatprep.mubr.f32.mxu0 0.0
    %147 = vmatmul.mubr.f32.gmra.mrb[0].mxu0 %v59
    %v148 = vpop.f32.mrb[0].mxu0
    %v149 = vadd.f32 0.0, %v148
    %v150 = vpop.f32.mrb[0].mxu0
    %151 = vmatprep.mubr.f32.mxu0 0.0
    %152 = vmatmul.mubr.f32.gmra.mrb[0].mxu0 %v60
    %v153 = vpop.f32.mrb[0].mxu0
    %v154 = vadd.f32 0.0, %v153
    %v155 = vpop.f32.mrb[0].mxu0
    %156 = vmatprep.mubr.f32.mxu0 0.0
    %157 = vmatmul.mubr.f32.gmra.mrb[0].mxu0 %v61
    %v158 = vpop.f32.mrb[0].mxu0
    %v159 = vadd.f32 0.0, %v158
    %v160 = vpop.f32.mrb[0].mxu0
    %161 = vmatprep.mubr.f32.mxu0 0.0
    %162 = vmatmul.mubr.f32.gmra.mrb[0].mxu0 %v62
    %v163 = vpop.f32.mrb[0].mxu0
    %v164 = vadd.f32 0.0, %v163
    %v165 = vpop.f32.mrb[0].mxu0
    %166 = vdwg.mxu0
    %v168 = vlaneseq
    %v169 = vshrl.u32 %v168, 7
    %v170 = vsub.s32 0, %v169
    %v171 = vrot.slane %v81, %v170
    %vm173 = vcmask 130048
    %v175 = vsel %vm173, %v63, 0
    %v178 = vsel %vm173, %v64, 0
    %180 = vmatprep.subr.mxu0 0.0
    %181 = vmatpush1.msra.mxu0 %v149
    %182 = vmatprep.subr.mxu0 0.0
    %183 = vmatpush1.msra.mxu0 %v154
    %184 = vmatprep.subr.mxu0 0.0
    %185 = vmatpush1.msra.mxu0 0.0
    %186 = vmatprep.subr.mxu0 0.0
    %187 = vmatpush1.msra.mxu0 0.0
    %188 = vmatprep.subr.mxu0 0.0
    %189 = vmatpush1.msra.mxu0 0.0
    %190 = vmatprep.subr.mxu0 0.0
    %191 = vmatpush1.msra.mxu0 0.0
    %192 = vmatprep.subr.mxu0 0.0
    %193 = vmatpush1.msra.mxu0 0.0
    %194 = vmatprep.subr.mxu0 0.0
    %195 = vmatpush1.msra.mxu0 0.0
    %196 = vmatprep.subr.mxu0 0.0
    %197 = vmatpush1.msra.mxu0 0.0
    %198 = vmatprep.subr.mxu0 0.0
    %199 = vmatpush1.msra.mxu0 0.0
    %200 = vmatprep.subr.mxu0 0.0
    %201 = vmatpush1.msra.mxu0 0.0
    %202 = vmatprep.subr.mxu0 0.0
    %203 = vmatpush1.msra.mxu0 0.0
    %204 = vmatprep.subr.mxu0 0.0
    %205 = vmatpush1.msra.mxu0 0.0
    %206 = vmatprep.subr.mxu0 0.0
    %207 = vmatpush1.msra.mxu0 0.0
    %208 = vmatprep.subr.mxu0 0.0
    %209 = vmatpush1.msra.mxu0 0.0
    %210 = vmatprep.subr.mxu0 0.0
    %211 = vmatpush1.msra.mxu0 0.0
    %212 = vmatprep.subr.mxu0 0.0
    %213 = vmatpush1.msra.mxu0 0.0
    %214 = vmatprep.subr.mxu0 0.0
    %215 = vmatpush1.msra.mxu0 0.0
    %216 = vmatprep.subr.mxu0 0.0
    %217 = vmatpush1.msra.mxu0 0.0
    %218 = vmatprep.subr.mxu0 0.0
    %219 = vmatpush1.msra.mxu0 0.0
    %220 = vmatprep.subr.mxu0 0.0
    %221 = vmatpush1.msra.mxu0 0.0
    %222 = vmatprep.subr.mxu0 0.0
    %223 = vmatpush1.msra.mxu0 0.0
    %224 = vmatprep.subr.mxu0 0.0
    %225 = vmatpush1.msra.mxu0 0.0
    %226 = vmatprep.subr.mxu0 0.0
    %227 = vmatpush1.msra.mxu0 0.0
    %228 = vmatprep.subr.mxu0 0.0
    %229 = vmatpush1.msra.mxu0 0.0
    %230 = vmatprep.subr.mxu0 0.0
    %231 = vmatpush1.msra.mxu0 0.0
    %232 = vmatprep.subr.mxu0 0.0
    %233 = vmatpush1.msra.mxu0 0.0
    %234 = vmatprep.subr.mxu0 0.0
    %235 = vmatpush1.msra.mxu0 0.0
    %236 = vmatprep.subr.mxu0 0.0
    %237 = vmatpush1.msra.mxu0 0.0
    %238 = vmatprep.subr.mxu0 0.0
    %239 = vmatpush1.msra.mxu0 0.0
    %240 = vmatprep.subr.mxu0 0.0
    %241 = vmatpush1.msra.mxu0 0.0
    %242 = vmatprep.subr.mxu0 0.0
    %243 = vmatpush1.msra.mxu0 0.0
    %244 = vmatprep.mubr.f32.mxu0 0.0
    %245 = vmatmul.mubr.f32.gmra.mrb[0].mxu0 %v175
    %v246 = vpop.f32.mrb[0].mxu0
    %v247 = vadd.f32 %v171, %v246
    %v248 = vpop.f32.mrb[0].mxu0
    %249 = vmatprep.mubr.f32.mxu0 0.0
    %250 = vmatmul.mubr.f32.gmra.mrb[0].mxu0 %v178
    %v251 = vpop.f32.mrb[0].mxu0
    %v252 = vadd.f32 %v171, %v251
    %v253 = vpop.f32.mrb[0].mxu0
    %254 = vdwg.mxu0
    %v255 = vmax.f32 %v247, 0.0
    %v256 = vmax.f32 %v252, 0.0
    %257 = vmatprep.subr.mxu0 0.0
    %258 = vmatpush1.msra.mxu0 %v159
    %259 = vmatprep.subr.mxu0 0.0
    %260 = vmatpush1.msra.mxu0 %v164
    %261 = vmatprep.subr.mxu0 0.0
    %262 = vmatpush1.msra.mxu0 0.0
    %263 = vmatprep.subr.mxu0 0.0
    %264 = vmatpush1.msra.mxu0 0.0
    %265 = vmatprep.subr.mxu0 0.0
    %266 = vmatpush1.msra.mxu0 0.0
    %267 = vmatprep.subr.mxu0 0.0
    %268 = vmatpush1.msra.mxu0 0.0
    %269 = vmatprep.subr.mxu0 0.0
    %270 = vmatpush1.msra.mxu0 0.0
    %271 = vmatprep.subr.mxu0 0.0
    %272 = vmatpush1.msra.mxu0 0.0
    %273 = vmatprep.subr.mxu0 0.0
    %274 = vmatpush1.msra.mxu0 0.0
    %275 = vmatprep.subr.mxu0 0.0
    %276 = vmatpush1.msra.mxu0 0.0
    %277 = vmatprep.subr.mxu0 0.0
    %278 = vmatpush1.msra.mxu0 0.0
    %279 = vmatprep.subr.mxu0 0.0
    %280 = vmatpush1.msra.mxu0 0.0
    %281 = vmatprep.subr.mxu0 0.0
    %282 = vmatpush1.msra.mxu0 0.0
    %283 = vmatprep.subr.mxu0 0.0
    %284 = vmatpush1.msra.mxu0 0.0
    %285 = vmatprep.subr.mxu0 0.0
    %286 = vmatpush1.msra.mxu0 0.0
    %287 = vmatprep.subr.mxu0 0.0
    %288 = vmatpush1.msra.mxu0 0.0
    %289 = vmatprep.subr.mxu0 0.0
    %290 = vmatpush1.msra.mxu0 0.0
    %291 = vmatprep.subr.mxu0 0.0
    %292 = vmatpush1.msra.mxu0 0.0
    %293 = vmatprep.subr.mxu0 0.0
    %294 = vmatpush1.msra.mxu0 0.0
    %295 = vmatprep.subr.mxu0 0.0
    %296 = vmatpush1.msra.mxu0 0.0
    %297 = vmatprep.subr.mxu0 0.0
    %298 = vmatpush1.msra.mxu0 0.0
    %299 = vmatprep.subr.mxu0 0.0
    %300 = vmatpush1.msra.mxu0 0.0
    %301 = vmatprep.subr.mxu0 0.0
    %302 = vmatpush1.msra.mxu0 0.0
    %303 = vmatprep.subr.mxu0 0.0
    %304 = vmatpush1.msra.mxu0 0.0
    %305 = vmatprep.subr.mxu0 0.0
    %306 = vmatpush1.msra.mxu0 0.0
    %307 = vmatprep.subr.mxu0 0.0
    %308 = vmatpush1.msra.mxu0 0.0
    %309 = vmatprep.subr.mxu0 0.0
    %310 = vmatpush1.msra.mxu0 0.0
    %311 = vmatprep.subr.mxu0 0.0
    %312 = vmatpush1.msra.mxu0 0.0
    %313 = vmatprep.subr.mxu0 0.0
    %314 = vmatpush1.msra.mxu0 0.0
    %315 = vmatprep.subr.mxu0 0.0
    %316 = vmatpush1.msra.mxu0 0.0
    %317 = vmatprep.subr.mxu0 0.0
    %318 = vmatpush1.msra.mxu0 0.0
    %319 = vmatprep.subr.mxu0 0.0
    %320 = vmatpush1.msra.mxu0 0.0
    %321 = vmatprep.mubr.f32.mxu0 0.0
    %322 = vmatmul.mubr.f32.gmra.mrb[0].mxu0 %v175
    %v323 = vpop.f32.mrb[0].mxu0
    %v324 = vadd.f32 %v171, %v323
    %v325 = vpop.f32.mrb[0].mxu0
    %326 = vmatprep.mubr.f32.mxu0 0.0
    %327 = vmatmul.mubr.f32.gmra.mrb[0].mxu0 %v178
    %v328 = vpop.f32.mrb[0].mxu0
    %v329 = vadd.f32 %v171, %v328
    %v330 = vpop.f32.mrb[0].mxu0
    %331 = vdwg.mxu0
    %v332 = vmax.f32 %v324, 0.0
    %v333 = vmax.f32 %v329, 0.0
    %334 = vst [vmem:[#allocation8] sm:$0xff] %v255
    %335 = vst [vmem:[#allocation8 + $0x8] sm:$0xff] %v256
    %336 = vst [vmem:[#allocation8 + $0x10] sm:$0xff] %v332
    %337 = vst [vmem:[#allocation8 + $0x18] sm:$0xff] %v333
    // Predicated region
    $region30: #{tpu_custom_call.1} parent=1 // pred_check
      _
    $region31: #{tpu_custom_call.1} parent=1 // pred_check_branch
      %339 = sbr.rel (0) target = $region33
    $region32: #{tpu_custom_call.1} parent=1 // pred_region
      %s341 = ssub.s32 512, 512
      %342 = vsyncadd [#allocation4], %s341
      %s343 = sshll.u32 [#allocation8], 4
      %s344 = int_to_ptr.vmem [resolvable:$true] %s343
      %349 = dma.vmem_to_hbm [thread:$0]  %s344, 512, %s4, [#allocation4], 128, 128, 8
    $region33: #{tpu_custom_call.1} parent=1 // pred_fallthru
      _
    // Predicated region
    $region34: #{tpu_custom_call.1} parent=1 // pred_check
      _
    $region35: #{tpu_custom_call.1} parent=1 // pred_check_branch
      %351 = sbr.rel (0) target = $region37
    $region36: #{tpu_custom_call.1} parent=1 // pred_region
      %352 = dma.done [#allocation4], 512
    $region37: #{tpu_custom_call.1} parent=1 // pred_fallthru
      _
    %353 = vsyncpa [#allocation3], 1
    %354 = vsyncpa [#allocation6], 1
    %355 = vsyncpa [#allocation4], 1

</llo_original>
